<compile_context>
chip_gen: v6e
topology: v6e:2x2x1
jax: 0.10.0
libtpu: 0.0.40
codegen_flags: <defaults>
</compile_context>

<pallas_src>
import functools

import jax
import jax.numpy as jnp
from jax import lax
from jax.experimental import pallas as pl
from jax.experimental.pallas import tpu as pltpu

# ----- Deterministic module config (the CombinedLoss __init__ arguments) -----
W_MSE = 1.0
W_L1 = 0.5
W_HUBER = 0.25
HUBER_BETA = 1.0  # SmoothL1Loss default

_LANES = 128
_CHUNK_ROWS = 256                  # in-kernel compute chunk (128 KiB f32 temps)
_BLOCK_BYTES = 4 * 1024 * 1024     # DMA block budget per input (bytes)
_VMEM_LIMIT = 40 * 1024 * 1024     # explicit scoped-VMEM limit (covers v5e/v6e/v7x)

# Pre-folded per-element loss:  W_MSE*d^2 + W_L1*|d| + W_HUBER*huber(d)
#   |d| <  beta :  (W_MSE + 0.5*W_HUBER/beta) * d^2 + W_L1 * |d|
#   |d| >= beta :   W_MSE * d^2 + (W_L1 + W_HUBER) * |d| - 0.5*W_HUBER*beta
_C_LT_SQ = W_MSE + 0.5 * W_HUBER / HUBER_BETA   # 1.125
_C_LT_AD = W_L1                                 # 0.5
_C_GE_SQ = W_MSE                                # 1.0
_C_GE_AD = W_L1 + W_HUBER                       # 0.75
_C_GE_B = -0.5 * W_HUBER * HUBER_BETA           # -0.125


def _elementwise_loss_f32(x, t):
    d = x - t
    ad = jnp.abs(d)
    sq = d * d
    return jnp.where(ad < HUBER_BETA,
                     _C_LT_SQ * sq + _C_LT_AD * ad,
                     _C_GE_SQ * sq + _C_GE_AD * ad + _C_GE_B)


def _chunk_partial(x_ref, t_ref, r0, chunk_rows, *, masked, row_base, rows):
    """Per-chunk weighted-loss partial sum, shape (1, 128)."""
    x = x_ref[pl.ds(r0, chunk_rows), :].astype(jnp.float32)
    t = t_ref[pl.ds(r0, chunk_rows), :].astype(jnp.float32)
    loss = _elementwise_loss_f32(x, t)
    if masked:
        row_ids = (row_base + r0
                   + lax.broadcasted_iota(jnp.int32, (chunk_rows, _LANES), 0))
        loss = jnp.where(row_ids < rows, loss, 0.0)
    return loss.sum(axis=0, keepdims=True)


def _combined_loss_kernel(x_ref, t_ref, out_ref, acc_ref, *,
                          block_rows, rows, n_inner, needs_mask,
                          first_masked_tile):
    j = pl.program_id(0)   # core axis (CORE_PARALLEL on v7x, size 1 elsewhere)
    i = pl.program_id(1)   # sequential reduction axis
    tile_idx = j * n_inner + i
    row_base = tile_idx * block_rows

    n_full = block_rows // _CHUNK_ROWS
    tail_rows = block_rows - n_full * _CHUNK_ROWS   # static; nonzero only for small inputs

    @pl.when(i == 0)
    def _init():
        acc_ref[...] = jnp.zeros_like(acc_ref)

    def _accumulate(masked):
        part = jnp.zeros((1, _LANES), jnp.float32)
        if n_full > 0:
            def body(c, p):
                r0 = pl.multiple_of(c * _CHUNK_ROWS, _CHUNK_ROWS)
                return p + _chunk_partial(x_ref, t_ref, r0, _CHUNK_ROWS,
                                          masked=masked, row_base=row_base,
                                          rows=rows)
            part = lax.fori_loop(0, n_full, body, part)
        if tail_rows > 0:
            part = part + _chunk_partial(x_ref, t_ref, n_full * _CHUNK_ROWS,
                                         tail_rows, masked=masked,
                                         row_base=row_base, rows=rows)
        acc_ref[...] += part

    if not needs_mask:
        _accumulate(False)
    elif first_masked_tile <= 0:
        _accumulate(True)        # every tile is (possibly) partial
    else:
        # Only the partial last real tile and clamped duplicate tiles pay the
        # mask; all other tiles take the cheap unmasked path.
        @pl.when(tile_idx >= first_masked_tile)
        def _masked():
            _accumulate(True)

        @pl.when(tile_idx < first_masked_tile)
        def _unmasked():
            _accumulate(False)

    @pl.when(i == n_inner - 1)
    def _finalize():
        out_ref[...] = acc_ref[...]


def _num_tensorcores() -> int:
    """2 TensorCores per device on v7x; 1 on v5e/v6e (and anything unknown)."""
    try:
        kind = jax.devices()[0].device_kind.lower()
    except Exception:  # pragma: no cover - defensive
        return 1
    return 2 if ("v7" in kind or "tpu7" in kind) else 1


def combined_loss(inputs: jax.Array, targets: jax.Array) -> jax.Array:
    """Weighted combination of MSE + L1 + SmoothL1 (all mean-reduced)."""
    assert inputs.shape == targets.shape, "inputs/targets must have same shape"
    n_elems = inputs.size
    inv_n = jnp.float32(1.0 / n_elems)

    flat_x = inputs.reshape(-1)   # native dtype; f32 cast happens per-chunk in VMEM
    flat_t = targets.reshape(-1)

    rem = n_elems % _LANES
    aligned = n_elems - rem

    # Ragged lane tail (<128 elems): reduced by XLA on a tiny slice instead of
    # jnp.pad-copying both full inputs before the kernel.
    tail_sum = jnp.float32(0.0)
    if rem:
        tail_sum = jnp.sum(_elementwise_loss_f32(
            flat_x[aligned:].astype(jnp.float32),
            flat_t[aligned:].astype(jnp.float32)))
        if aligned == 0:
            return tail_sum * inv_n
        # TODO(synk): the aligned-prefix slice below still materializes one copy
        # of each ragged input; a truly copy-free ragged path needs an
        # element-masked manual DMA over the flat arrays.
        flat_x = flat_x[:aligned]
        flat_t = flat_t[:aligned]

    rows = aligned // _LANES
    x2d = flat_x.reshape(rows, _LANES)
    t2d = flat_t.reshape(rows, _LANES)

    # Byte-budgeted block: ~4 MiB per input block regardless of dtype.
    itemsize = jnp.dtype(inputs.dtype).itemsize
    rows_budget = max(_CHUNK_ROWS, _BLOCK_BYTES // (_LANES * itemsize))
    block_rows = rows if rows <= rows_budget else rows_budget

    total_tiles = pl.cdiv(rows, block_rows)
    n_cores = _num_tensorcores()
    n_par = n_cores if (n_cores > 1 and total_tiles >= n_cores) else 1
    n_inner = pl.cdiv(total_tiles, n_par)

    has_partial = (rows % block_rows) != 0
    has_dupes = (n_par * n_inner) != total_tiles
    needs_mask = has_partial or has_dupes
    first_masked_tile = total_tiles - 1 if has_partial else total_tiles

    def in_map(j, i):
        # Clamp so duplicate tiles (fully masked in-kernel) stay in bounds.
        return (jnp.minimum(j * n_inner + i, total_tiles - 1), 0)

    kernel = functools.partial(
        _combined_loss_kernel,
        block_rows=block_rows, rows=rows, n_inner=n_inner,
        needs_mask=needs_mask, first_masked_tile=first_masked_tile)

    if n_par > 1:
        dim_sem = (pltpu.CORE_PARALLEL, pltpu.ARBITRARY)   # real 2-TC split (v7x)
    else:
        dim_sem = ("arbitrary", "arbitrary")               # 1-TC chips: no dummy split

    partials = pl.pallas_call(
        kernel,
        out_shape=jax.ShapeDtypeStruct((n_par, _LANES), jnp.float32),
        grid_spec=pltpu.PrefetchScalarGridSpec(
            num_scalar_prefetch=0,
            grid=(n_par, n_inner),
            in_specs=[
                pl.BlockSpec((block_rows, _LANES), in_map),
                pl.BlockSpec((block_rows, _LANES), in_map),
            ],
            out_specs=pl.BlockSpec((1, _LANES), lambda j, i: (j, 0)),
            scratch_shapes=[pltpu.VMEM((1, _LANES), jnp.float32)],
        ),
        compiler_params=pltpu.CompilerParams(
            dimension_semantics=dim_sem,
            vmem_limit_bytes=_VMEM_LIMIT,
        ),
    )(x2d, t2d)

    # Tiny (n_par, 128) cross-lane reduce + mean normalization done by XLA.
    return (jnp.sum(partials) + tail_sum) * inv_n


def _reference_combined_loss(inputs, targets):
    x = inputs.astype(jnp.float32)
    t = targets.astype(jnp.float32)
    d = x - t
    ad = jnp.abs(d)
    mse = jnp.mean(d * d)
    l1 = jnp.mean(ad)
    huber = jnp.mean(
        jnp.where(ad < HUBER_BETA, 0.5 * d * d / HUBER_BETA, ad - 0.5 * HUBER_BETA)
    )
    return W_MSE * mse + W_L1 * l1 + W_HUBER * huber


if __name__ == "__main__":
    key = jax.random.PRNGKey(0)
    k1, k2 = jax.random.split(key)
    # NCHW, small shapes consistent with an image-regression loss.
    inputs = jax.random.normal(k1, (2, 4, 16, 16), dtype=jnp.float32)
    targets = jax.random.normal(k2, (2, 4, 16, 16), dtype=jnp.float32)

    loss = combined_loss(inputs, targets)
    jax.block_until_ready(loss)

    ref = _reference_combined_loss(inputs, targets)
    assert jnp.allclose(loss, ref, rtol=1e-5, atol=1e-5), (loss, ref)
    print("KERNEL_OK")
</pallas_src>

<mosaic_0001>
module attributes {stable_mosaic.version = 11 : i64} {
  func.func @_combined_loss_kernel(%arg0: i32, %arg1: i32, %arg2: memref<16x128xf32, #tpu.memory_space<vmem>>, %arg3: memref<16x128xf32, #tpu.memory_space<vmem>>, %arg4: memref<1x128xf32, #tpu.memory_space<vmem>>, %arg5: memref<1x128xf32, #tpu.memory_space<vmem>>) attributes {dimension_semantics = [#tpu.dimension_semantics<arbitrary>, #tpu.dimension_semantics<arbitrary>], iteration_bounds = array<i64: 1, 1>, scalar_prefetch = 0 : i64, scratch_operands = 1 : i64, tpu.core_type = #tpu.core_type<tc>, window_params = [{transform_indices = @transform_0, window_bounds = array<i64: 16, 128>}, {transform_indices = @transform_1, window_bounds = array<i64: 16, 128>}, {transform_indices = @transform_2, window_bounds = array<i64: 1, 128>}]} {
    %c0_i32 = arith.constant 0 : i32
    %0 = arith.cmpi eq, %arg1, %c0_i32 : i32
    %1 = arith.extui %0 : i1 to i32
    %c0_i32_0 = arith.constant 0 : i32
    %2 = arith.cmpi ne, %1, %c0_i32_0 : i32
    scf.if %2 {
      %cst_17 = arith.constant 0.000000e+00 : f32
      %33 = vector.broadcast %cst_17 : f32 to vector<1x128xf32>
      %c0_18 = arith.constant 0 : index
      %c0_19 = arith.constant 0 : index
      %34 = vector.load %arg5[%c0_18, %c0_19] : memref<1x128xf32, #tpu.memory_space<vmem>>, vector<1x128xf32>
      tpu.vector_store %arg5[%c0_18, %c0_19], %33 {strides = array<i32>} : memref<1x128xf32, #tpu.memory_space<vmem>>, vector<1x128xf32>,
    } else {
    }
    %cst = arith.constant 0.000000e+00 : f32
    %3 = vector.broadcast %cst : f32 to vector<1x128xf32>
    %c0 = arith.constant 0 : index
    %c0_1 = arith.constant 0 : index
    %4 = vector.load %arg2[%c0, %c0_1] : memref<16x128xf32, #tpu.memory_space<vmem>>, vector<16x128xf32>
    %c0_2 = arith.constant 0 : index
    %c0_3 = arith.constant 0 : index
    %5 = vector.load %arg3[%c0_2, %c0_3] : memref<16x128xf32, #tpu.memory_space<vmem>>, vector<16x128xf32>
    %6 = arith.subf %4, %5 : vector<16x128xf32>
    %7 = math.absf %6 : vector<16x128xf32>
    %8 = arith.mulf %6, %6 : vector<16x128xf32>
    %cst_4 = arith.constant 1.000000e+00 : f32
    %9 = vector.broadcast %cst_4 : f32 to vector<16x128xf32>
    %10 = arith.cmpf olt, %7, %9 : vector<16x128xf32>
    %cst_5 = arith.constant 1.125000e+00 : f32
    %11 = vector.broadcast %cst_5 : f32 to vector<16x128xf32>
    %12 = arith.mulf %11, %8 : vector<16x128xf32>
    %cst_6 = arith.constant 5.000000e-01 : f32
    %13 = vector.broadcast %cst_6 : f32 to vector<16x128xf32>
    %14 = arith.mulf %13, %7 : vector<16x128xf32>
    %15 = arith.addf %12, %14 : vector<16x128xf32>
    %cst_7 = arith.constant 1.000000e+00 : f32
    %16 = vector.broadcast %cst_7 : f32 to vector<16x128xf32>
    %17 = arith.mulf %16, %8 : vector<16x128xf32>
    %cst_8 = arith.constant 7.500000e-01 : f32
    %18 = vector.broadcast %cst_8 : f32 to vector<16x128xf32>
    %19 = arith.mulf %18, %7 : vector<16x128xf32>
    %20 = arith.addf %17, %19 : vector<16x128xf32>
    %cst_9 = arith.constant -1.250000e-01 : f32
    %21 = vector.broadcast %cst_9 : f32 to vector<16x128xf32>
    %22 = arith.addf %20, %21 : vector<16x128xf32>
    %23 = arith.select %10, %15, %22 : vector<16x128xi1>, vector<16x128xf32>
    %cst_10 = arith.constant dense<0.000000e+00> : vector<128xf32>
    %24 = vector.multi_reduction <add>, %23, %cst_10 [0] : vector<16x128xf32> to vector<128xf32>
    %25 = vector.shape_cast %24 : vector<128xf32> to vector<1x128xf32>
    %26 = arith.addf %3, %25 : vector<1x128xf32>
    %c0_11 = arith.constant 0 : index
    %c0_12 = arith.constant 0 : index
    %27 = vector.load %arg5[%c0_11, %c0_12] : memref<1x128xf32, #tpu.memory_space<vmem>>, vector<1x128xf32>
    %28 = arith.addf %27, %26 : vector<1x128xf32>
    %c0_13 = arith.constant 0 : index
    %c0_14 = arith.constant 0 : index
    %29 = vector.load %arg5[%c0_13, %c0_14] : memref<1x128xf32, #tpu.memory_space<vmem>>, vector<1x128xf32>
    tpu.vector_store %arg5[%c0_13, %c0_14], %28 {strides = array<i32>} : memref<1x128xf32, #tpu.memory_space<vmem>>, vector<1x128xf32>,
    %c0_i32_15 = arith.constant 0 : i32
    %30 = arith.cmpi eq, %arg1, %c0_i32_15 : i32
    %31 = arith.extui %30 : i1 to i32
    %c0_i32_16 = arith.constant 0 : i32
    %32 = arith.cmpi ne, %31, %c0_i32_16 : i32
    scf.if %32 {
      %c0_17 = arith.constant 0 : index
      %c0_18 = arith.constant 0 : index
      %33 = vector.load %arg5[%c0_17, %c0_18] : memref<1x128xf32, #tpu.memory_space<vmem>>, vector<1x128xf32>
      %c0_19 = arith.constant 0 : index
      %c0_20 = arith.constant 0 : index
      %34 = vector.load %arg4[%c0_19, %c0_20] : memref<1x128xf32, #tpu.memory_space<vmem>>, vector<1x128xf32>
      tpu.vector_store %arg4[%c0_19, %c0_20], %33 {strides = array<i32>} : memref<1x128xf32, #tpu.memory_space<vmem>>, vector<1x128xf32>,
    } else {
    }
    return
  }
  func.func @transform_0(%arg0: i32, %arg1: i32) -> (i32, i32) {
    %c1_i32 = arith.constant 1 : i32
    %0 = arith.muli %arg0, %c1_i32 : i32
    %1 = arith.addi %0, %arg1 : i32
    %c0_i32 = arith.constant 0 : i32
    %2 = arith.minsi %1, %c0_i32 : i32
    %c0_i32_0 = arith.constant 0 : i32
    %c0_i32_1 = arith.constant 0 : i32
    return %2, %c0_i32_0 : i32, i32
  }
  func.func @transform_1(%arg0: i32, %arg1: i32) -> (i32, i32) {
    %c1_i32 = arith.constant 1 : i32
    %0 = arith.muli %arg0, %c1_i32 : i32
    %1 = arith.addi %0, %arg1 : i32
    %c0_i32 = arith.constant 0 : i32
    %2 = arith.minsi %1, %c0_i32 : i32
    %c0_i32_0 = arith.constant 0 : i32
    %c0_i32_1 = arith.constant 0 : i32
    return %2, %c0_i32_0 : i32, i32
  }
  func.func @transform_2(%arg0: i32, %arg1: i32) -> (i32, i32) {
    %c0_i32 = arith.constant 0 : i32
    %c0_i32_0 = arith.constant 0 : i32
    return %arg0, %c0_i32 : i32, i32
  }
}

</mosaic_0001>

<llo_original>
// kernel: tpu_custom_call.1
$region0: #{tpu_custom_call.1}
  #allocation0 [shape = 'u32[]', space=smem, size = 0x4, offset = 0x4, fixed_abs, tag = 'smem constant byte address 0x4 - core index']
  #allocation1 [shape = 'u32[144,128]{1,0:T(1,128)}', space=vmem, size = 0x12000, scoped, tag = 'internal scratch']
  #allocation2 [shape = 'f32[1,128]{1,0:T(1,128)}', space=vmem, size = 0x200, scoped, tag = 'scratch operand']
  %s0 = inlined_call_operand.hbm [shape: f32[16,128], index: 0, kind: input, shape index: {}]
  %s1 = inlined_call_operand.hbm [shape: f32[16,128], index: 1, kind: input, shape index: {}]
  %s2 = inlined_call_operand.hbm [shape: f32[1,128], index: 2, kind: output, shape index: {}]
  %s3 = sld [smem:[#allocation0]]
  $region34: #{tpu_custom_call.1} parent=0
    _
  %s5 = ssub.s32 1, %s3
  %s6 = scalar_select 0, %s5, %s3
  $region1: #{tpu_custom_call.1} parent=0
    #allocation3 [shape = 'u8[8192]{0}', space=vmem, size = 0x2000, scoped, tag = 'input window, operand 0, single buffered']
    #allocation4 [shape = 's32[1]{0}', space=sflag, size = 0x4, scoped, tag = 'scoped memory for tpu_custom_call.1']
    #allocation5 [shape = 's32[1]{0}', space=sflag, size = 0x4, scoped, tag = 'scoped memory for tpu_custom_call.1']
    #allocation6 [shape = 'u8[8192]{0}', space=vmem, size = 0x2000, scoped, tag = 'input window, operand 1, single buffered']
    #allocation7 [shape = 's32[1]{0}', space=sflag, size = 0x4, scoped, tag = 'scoped memory for tpu_custom_call.1']
    #allocation8 [shape = 'u8[512]{0}', space=vmem, size = 0x400, scoped, tag = 'output window, operand 0, single buffered']
    %7 = vsyncpa [#allocation4], 0
    %8 = vsyncpa [#allocation7], 0
    %9 = vsyncpa [#allocation5], 0
    // Predicated region
    $region2: #{tpu_custom_call.1} parent=1 // pred_check
      _
    $region3: #{tpu_custom_call.1} parent=1 // pred_check_branch
      %11 = sbr.rel (0) target = $region5
    $region4: #{tpu_custom_call.1} parent=1 // pred_region
      %s12 = sadd.s32 0, 0
      %p13 = scmp.lt.s32.totalorder %s12, 0
      %s14 = scalar_select %p13, %s12, 0
      %s15 = smul.u32 2, %s14
      %s17 = ssub.s32 256, 256
      %18 = vsyncadd [#allocation4], %s17
      %s19 = smul.addr %s15, 128
      %s20 = scalar_lea.hbm %s0, %s19
      %s21 = sshll.u32 [#allocation3], 4
      %s22 = int_to_ptr.vmem [resolvable:$true] %s21
      %27 = dma.hbm_to_vmem [thread:$0]  %s20, 256, %s22, [#allocation4], 128, 128, 8
    $region5: #{tpu_custom_call.1} parent=1 // pred_fallthru
      _
    // Predicated region
    $region6: #{tpu_custom_call.1} parent=1 // pred_check
      _
    $region7: #{tpu_custom_call.1} parent=1 // pred_check_branch
      %29 = sbr.rel (0) target = $region9
    $region8: #{tpu_custom_call.1} parent=1 // pred_region
      %s30 = sadd.s32 0, 0
      %p31 = scmp.lt.s32.totalorder %s30, 0
      %s32 = scalar_select %p31, %s30, 0
      %s33 = smul.u32 2, %s32
      %s35 = ssub.s32 256, 256
      %36 = vsyncadd [#allocation7], %s35
      %s37 = smul.addr %s33, 128
      %s38 = scalar_lea.hbm %s1, %s37
      %s39 = sshll.u32 [#allocation6], 4
      %s40 = int_to_ptr.vmem [resolvable:$true] %s39
      %45 = dma.hbm_to_vmem [thread:$0]  %s38, 256, %s40, [#allocation7], 128, 128, 8
    $region9: #{tpu_custom_call.1} parent=1 // pred_fallthru
      _
    // Predicated region
    $region10: #{tpu_custom_call.1} parent=1 // pred_check
      _
    $region11: #{tpu_custom_call.1} parent=1 // pred_check_branch
      %47 = sbr.rel (0) target = $region13
    $region12: #{tpu_custom_call.1} parent=1 // pred_region
      %48 = dma.done [#allocation4], 256
    $region13: #{tpu_custom_call.1} parent=1 // pred_fallthru
      _
    // Predicated region
    $region14: #{tpu_custom_call.1} parent=1 // pred_check
      _
    $region15: #{tpu_custom_call.1} parent=1 // pred_check_branch
      %50 = sbr.rel (0) target = $region17
    $region16: #{tpu_custom_call.1} parent=1 // pred_region
      %51 = dma.done [#allocation7], 256
    $region17: #{tpu_custom_call.1} parent=1 // pred_fallthru
      _
    %s52 = sadd.s32 0, 0
    %p53 = scmp.lt.s32.totalorder %s52, 0
    %s54 = scalar_select %p53, %s52, 0
    %s55 = smul.u32 2, %s54
    %s56 = sadd.s32 0, 0
    %p57 = scmp.lt.s32.totalorder %s56, 0
    %s58 = scalar_select %p57, %s56, 0
    %s59 = smul.u32 2, %s58
    %p60 = scmp.eq.s32.totalorder 0, 0
    // Predicated region
    $region18: #{tpu_custom_call.1} parent=1 // pred_check
      %p61 = pneg %p60
    $region19: #{tpu_custom_call.1} parent=1 // pred_check_branch
      %63 = sbr.rel (%p61) target = $region21
    $region20: #{tpu_custom_call.1} parent=1 // pred_region
      %64 = vst [vmem:[#allocation2] sm:$0x1] 0.0
    $region21: #{tpu_custom_call.1} parent=1 // pred_fallthru
      _
    %v65 = vld [vmem:[#allocation3] sm:$0xff]
    %v66 = vld [vmem:[#allocation3 + $0x8] sm:$0xff]
    %v67 = vld [vmem:[#allocation6] sm:$0xff]
    %v68 = vld [vmem:[#allocation6 + $0x8] sm:$0xff]
    %v69 = vsub.f32 %v65, %v67
    %v70 = vsub.f32 %v66, %v68
    %v71 = vand.u32 2147483647, %v69
    %v72 = vand.u32 2147483647, %v70
    %v73 = vmul.f32 %v69, %v69
    %v74 = vmul.f32 %v70, %v70
    %vm75 = vcmp.lt.f32.partialorder %v71, 1.0
    %vm76 = vcmp.lt.f32.partialorder %v72, 1.0
    %v77 = vmul.f32 %v73, 1.125
    %v78 = vmul.f32 %v74, 1.125
    %v79 = vmul.f32 %v71, 0.5
    %v80 = vmul.f32 %v72, 0.5
    %v81 = vadd.f32 %v77, %v79
    %v82 = vadd.f32 %v78, %v80
    %v83 = vmul.f32 %v71, 0.75
    %v84 = vmul.f32 %v72, 0.75
    %v85 = vadd.f32 %v73, %v83
    %v86 = vadd.f32 %v74, %v84
    %v87 = vadd.f32 %v85, -0.125
    %v88 = vadd.f32 %v86, -0.125
    %v89 = vsel %vm75, %v81, %v87
    %v90 = vsel %vm76, %v82, %v88
    %v91 = vadd.f32 %v89, %v90
    %v92 = vrot.slane %v91, 4
    %v93 = vadd.f32 %v91, %v92
    %v94 = vrot.slane %v93, 2
    %v95 = vadd.f32 %v93, %v94
    %v96 = vrot.slane %v95, 1
    %v97 = vadd.f32 %v95, %v96
    %v98 = vadd.f32 %v97, 0.0
    %v99 = vld [vmem:[#allocation2] sm:$0x1]
    %v100 = vadd.f32 %v99, %v98
    %101 = vst [vmem:[#allocation2] sm:$0x1] %v100
    // Predicated region
    $region22: #{tpu_custom_call.1} parent=1 // pred_check
      %p102 = pneg %p60
    $region23: #{tpu_custom_call.1} parent=1 // pred_check_branch
      %104 = sbr.rel (%p102) target = $region25
    $region24: #{tpu_custom_call.1} parent=1 // pred_region
      %v105 = vld [vmem:[#allocation2] sm:$0x1]
      %106 = vst [vmem:[#allocation8] sm:$0x1] %v105
    $region25: #{tpu_custom_call.1} parent=1 // pred_fallthru
      _
    // Predicated region
    $region26: #{tpu_custom_call.1} parent=1 // pred_check
      _
    $region27: #{tpu_custom_call.1} parent=1 // pred_check_branch
      %108 = sbr.rel (0) target = $region29
    $region28: #{tpu_custom_call.1} parent=1 // pred_region
      %s110 = ssub.s32 16, 16
      %111 = vsyncadd [#allocation5], %s110
      %s113 = sshll.u32 [#allocation8], 4
      %s114 = int_to_ptr.vmem [resolvable:$true] %s113
      %116 = dma.vmem_to_hbm [thread:$0]  %s114, 16, %s2, [#allocation5]
    $region29: #{tpu_custom_call.1} parent=1 // pred_fallthru
      _
    // Predicated region
    $region30: #{tpu_custom_call.1} parent=1 // pred_check
      _
    $region31: #{tpu_custom_call.1} parent=1 // pred_check_branch
      %118 = sbr.rel (0) target = $region33
    $region32: #{tpu_custom_call.1} parent=1 // pred_region
      %119 = dma.done [#allocation5], 16
    $region33: #{tpu_custom_call.1} parent=1 // pred_fallthru
      _
    %120 = vsyncpa [#allocation4], 1
    %121 = vsyncpa [#allocation7], 1
    %122 = vsyncpa [#allocation5], 1

</llo_original>
